<compile_context>
chip_gen: v7x
topology: tpu7x:2x2x1
jax: 0.10.0
libtpu: 0.0.40
codegen_flags: <defaults>
</compile_context>

<pallas_src>
import jax
import jax.numpy as jnp
from jax.experimental import pallas as pl
from jax.experimental.pallas import tpu as pltpu


def logreg_kernel(x_ref, w_ref, b_ref, o_ref):
    # x_ref: (TB, D) f32 VMEM tile
    # w_ref: (1, D)  f32 VMEM, resident across grid steps
    # b_ref: (1, 1)  f32 SMEM scalar
    # o_ref: (TB, 1) f32 VMEM tile
    prods = x_ref[...] * w_ref[...]                      # VPU: (TB, D)
    logits = jnp.sum(prods, axis=-1, keepdims=True)      # XLU lane-reduce -> (TB, 1)
    logits = logits + b_ref[0, 0]                        # scalar bias from SMEM
    o_ref[...] = jax.nn.sigmoid(logits)


def logistic_regression(x, w, b, *, target_tile_bytes=4 << 20):
    """x: (B, D) f32, w: (D, 1) f32, b: (1, 1) f32 -> (B, 1) f32."""
    x = jnp.asarray(x, jnp.float32)
    B, D = x.shape
    w_row = jnp.asarray(w, jnp.float32).reshape(1, D)
    b_s = jnp.asarray(b, jnp.float32).reshape(1, 1)

    # Batch tile: ~target_tile_bytes of x per tile, multiple of 8 sublanes,
    # clamped so tiny problems become a single block.
    tb = max(8, min(1024, target_tile_bytes // (D * 4)))
    tb = (tb // 8) * 8
    tb = min(tb, ((B + 7) // 8) * 8)

    b_pad = pl.cdiv(B, tb) * tb
    if b_pad != B:
        x = jnp.pad(x, ((0, b_pad - B), (0, 0)))

    out = pl.pallas_call(
        logreg_kernel,
        out_shape=jax.ShapeDtypeStruct((b_pad, 1), jnp.float32),
        grid_spec=pl.GridSpec(
            grid=(b_pad // tb,),
            in_specs=[
                pl.BlockSpec((tb, D), lambda i: (i, 0)),              # streamed x tiles
                pl.BlockSpec((1, D), lambda i: (0, 0)),               # resident weight row
                pl.BlockSpec(memory_space=pltpu.MemorySpace.SMEM),    # bias scalar in SMEM
            ],
            out_specs=pl.BlockSpec((tb, 1), lambda i: (i, 0)),
        ),
        compiler_params=pltpu.CompilerParams(
            dimension_semantics=("parallel",),
            vmem_limit_bytes=64 << 20,
        ),
        cost_estimate=pl.CostEstimate(
            flops=2 * b_pad * D,
            transcendentals=b_pad,
            bytes_accessed=4 * (b_pad * D + D + b_pad),
        ),
    )(x, w_row, b_s)
    return out[:B]


if __name__ == "__main__":
    input_size = 12
    batch = 8

    key = jax.random.PRNGKey(0)
    kx, kw, kb, kx2 = jax.random.split(key, 4)

    # Deterministic parameter init (mimics nn.Linear uniform(-1/sqrt(D), 1/sqrt(D)))
    bound = 1.0 / (input_size ** 0.5)
    w = jax.random.uniform(kw, (input_size, 1), jnp.float32, -bound, bound)
    b = jax.random.uniform(kb, (1, 1), jnp.float32, -bound, bound)

    x = jax.random.normal(kx, (batch, input_size), jnp.float32)

    y = logistic_regression(x, w, b)
    y = jax.block_until_ready(y)

    # Reference check in plain JAX
    y_ref = jax.nn.sigmoid(x @ w + b)
    assert y.shape == (batch, 1)
    assert jnp.allclose(y, y_ref, atol=1e-5, rtol=1e-5), "mismatch vs reference"

    # Second check exercising the batch-padding path (B not a multiple of 8)
    x2 = jax.random.normal(kx2, (37, input_size), jnp.float32)
    y2 = jax.block_until_ready(logistic_regression(x2, w, b))
    y2_ref = jax.nn.sigmoid(x2 @ w + b)
    assert y2.shape == (37, 1)
    assert jnp.allclose(y2, y2_ref, atol=1e-5, rtol=1e-5), "mismatch vs reference (padded)"

    print("KERNEL_OK")
</pallas_src>

<mosaic_0001>
module attributes {stable_mosaic.version = 11 : i64} {
  func.func @logreg_kernel(%arg0: i32, %arg1: memref<8x12xf32, #tpu.memory_space<vmem>>, %arg2: memref<1x12xf32, #tpu.memory_space<vmem>>, %arg3: memref<1x1xf32, #tpu.memory_space<smem>>, %arg4: memref<8x1xf32, #tpu.memory_space<vmem>>) attributes {dimension_semantics = [#tpu.dimension_semantics<parallel>], iteration_bounds = array<i64: 1>, scalar_prefetch = 0 : i64, scratch_operands = 0 : i64, tpu.core_type = #tpu.core_type<tc>, window_params = [{transform_indices = @transform_0, window_bounds = array<i64: 8, 12>}, {pipeline_mode = #tpu.pipeline_mode<synchronous>, transform_indices = @transform_1, window_bounds = array<i64: 1, 12>}, {transform_indices = @transform_2, window_bounds = array<i64: 1, 1>}, {transform_indices = @transform_3, window_bounds = array<i64: 8, 1>}]} {
    %c0 = arith.constant 0 : index
    %c0_0 = arith.constant 0 : index
    %0 = vector.load %arg1[%c0, %c0_0] : memref<8x12xf32, #tpu.memory_space<vmem>>, vector<8x12xf32>
    %c0_1 = arith.constant 0 : index
    %c0_2 = arith.constant 0 : index
    %1 = vector.load %arg2[%c0_1, %c0_2] : memref<1x12xf32, #tpu.memory_space<vmem>>, vector<1x12xf32>
    %2 = vector.broadcast %1 : vector<1x12xf32> to vector<8x12xf32>
    %3 = arith.mulf %0, %2 : vector<8x12xf32>
    %cst = arith.constant dense<0.000000e+00> : vector<8xf32>
    %4 = vector.multi_reduction <add>, %3, %cst [1] : vector<8x12xf32> to vector<8xf32>
    %5 = vector.shape_cast %4 : vector<8xf32> to vector<8x1xf32>
    %c0_3 = arith.constant 0 : index
    %c0_4 = arith.constant 0 : index
    %6 = memref.load %arg3[%c0_3, %c0_4] : memref<1x1xf32, #tpu.memory_space<smem>>
    %7 = vector.broadcast %6 : f32 to vector<8x1xf32>
    %8 = arith.addf %5, %7 : vector<8x1xf32>
    %9 = arith.negf %8 : vector<8x1xf32>
    %10 = math.exp %9 : vector<8x1xf32>
    %cst_5 = arith.constant 1.000000e+00 : f32
    %11 = vector.broadcast %cst_5 : f32 to vector<8x1xf32>
    %12 = arith.addf %11, %10 : vector<8x1xf32>
    %13 = arith.divf %11, %12 : vector<8x1xf32>
    %c0_6 = arith.constant 0 : index
    %c0_7 = arith.constant 0 : index
    %14 = vector.load %arg4[%c0_6, %c0_7] : memref<8x1xf32, #tpu.memory_space<vmem>>, vector<8x1xf32>
    tpu.vector_store %arg4[%c0_6, %c0_7], %13 {strides = array<i32>} : memref<8x1xf32, #tpu.memory_space<vmem>>, vector<8x1xf32>,
    return
  }
  func.func @transform_0(%arg0: i32) -> (i32, i32) {
    %c0_i32 = arith.constant 0 : i32
    %c0_i32_0 = arith.constant 0 : i32
    return %arg0, %c0_i32 : i32, i32
  }
  func.func @transform_1(%arg0: i32) -> (i32, i32) {
    %c0_i32 = arith.constant 0 : i32
    %c0_i32_0 = arith.constant 0 : i32
    %c0_i32_1 = arith.constant 0 : i32
    return %c0_i32, %c0_i32_0 : i32, i32
  }
  func.func @transform_2(%arg0: i32) -> (i32, i32) {
    %c0_i32 = arith.constant 0 : i32
    %c0_i32_0 = arith.constant 0 : i32
    %c0_i32_1 = arith.constant 0 : i32
    return %c0_i32, %c0_i32_0 : i32, i32
  }
  func.func @transform_3(%arg0: i32) -> (i32, i32) {
    %c0_i32 = arith.constant 0 : i32
    %c0_i32_0 = arith.constant 0 : i32
    return %arg0, %c0_i32 : i32, i32
  }
}

</mosaic_0001>

<llo_original>
// kernel: tpu_custom_call.1
$region0: #{tpu_custom_call.1}
  #allocation0 [shape = 'u32[]', space=smem, size = 0x4, offset = 0x4, fixed_abs, tag = 'smem constant byte address 0x4 - core index']
  #allocation1 [shape = 'u32[144,128]{1,0:T(1,128)}', space=vmem, size = 0x12000, scoped, tag = 'internal scratch']
  #allocation2 [shape = 'f32[1,1]{1,0:T(1,128)S(6)}', space=smem, size = 0x200, scoped, tag = 'scoped memory for tpu_custom_call.1']
  %s0 = inlined_call_operand.hbm [shape: f32[8,12], index: 0, kind: input, shape index: {}]
  %s1 = inlined_call_operand.hbm [shape: f32[1,12], index: 1, kind: input, shape index: {}]
  %s2 = inlined_call_operand.<no memory space> [shape: f32[1,1], index: 2, kind: input, shape index: {}]
  %s3 = inlined_call_operand.hbm [shape: f32[8,1], index: 3, kind: output, shape index: {}]
  %s4 = sld [smem:[#allocation0]]
  $region30: #{tpu_custom_call.1} parent=0
    _
  %s6 = ssub.s32 1, %s4
  %s7 = scalar_select 0, %s6, %s4
  %8 = sst [smem:[#allocation2]] %s2
  $region1: #{tpu_custom_call.1} parent=0
    #allocation3 [shape = 'u8[4096]{0}', space=vmem, size = 0x1000, scoped, tag = 'input window, operand 0, single buffered']
    #allocation4 [shape = 's32[1]{0}', space=sflag, size = 0x4, scoped, tag = 'scoped memory for tpu_custom_call.1']
    #allocation5 [shape = 's32[1]{0}', space=sflag, size = 0x4, scoped, tag = 'scoped memory for tpu_custom_call.1']
    #allocation6 [shape = 'u8[512]{0}', space=vmem, size = 0x400, scoped, tag = 'input window, operand 1, single buffered']
    #allocation7 [shape = 's32[1]{0}', space=sflag, size = 0x4, scoped, tag = 'scoped memory for tpu_custom_call.1']
    #allocation8 [shape = 'u8[4096]{0}', space=vmem, size = 0x1000, scoped, tag = 'output window, operand 0, single buffered']
    %9 = vsyncpa [#allocation4], 0
    %10 = vsyncpa [#allocation7], 0
    %11 = vsyncpa [#allocation5], 0
    // Predicated region
    $region2: #{tpu_custom_call.1} parent=1 // pred_check
      _
    $region3: #{tpu_custom_call.1} parent=1 // pred_check_branch
      %13 = sbr.rel (0) target = $region5
    $region4: #{tpu_custom_call.1} parent=1 // pred_region
      %s15 = ssub.s32 128, 128
      %16 = vsyncadd [#allocation4], %s15
      %s18 = sshll.u32 [#allocation3], 4
      %s19 = int_to_ptr.vmem [resolvable:$true] %s18
      %21 = dma.hbm_to_vmem [thread:$0]  %s0, 128, %s19, [#allocation4]
    $region5: #{tpu_custom_call.1} parent=1 // pred_fallthru
      _
    // Predicated region
    $region6: #{tpu_custom_call.1} parent=1 // pred_check
      _
    $region7: #{tpu_custom_call.1} parent=1 // pred_check_branch
      %23 = sbr.rel (0) target = $region9
    $region8: #{tpu_custom_call.1} parent=1 // pred_region
      %s25 = ssub.s32 16, 16
      %26 = vsyncadd [#allocation7], %s25
      %s28 = sshll.u32 [#allocation6], 4
      %s29 = int_to_ptr.vmem [resolvable:$true] %s28
      %31 = dma.hbm_to_vmem [thread:$0]  %s1, 16, %s29, [#allocation7]
    $region9: #{tpu_custom_call.1} parent=1 // pred_fallthru
      _
    // Predicated region
    $region10: #{tpu_custom_call.1} parent=1 // pred_check
      _
    $region11: #{tpu_custom_call.1} parent=1 // pred_check_branch
      %33 = sbr.rel (0) target = $region13
    $region12: #{tpu_custom_call.1} parent=1 // pred_region
      _
    $region13: #{tpu_custom_call.1} parent=1 // pred_fallthru
      _
    // Predicated region
    $region14: #{tpu_custom_call.1} parent=1 // pred_check
      _
    $region15: #{tpu_custom_call.1} parent=1 // pred_check_branch
      %35 = sbr.rel (0) target = $region17
    $region16: #{tpu_custom_call.1} parent=1 // pred_region
      %36 = dma.done [#allocation4], 128
    $region17: #{tpu_custom_call.1} parent=1 // pred_fallthru
      _
    // Predicated region
    $region18: #{tpu_custom_call.1} parent=1 // pred_check
      _
    $region19: #{tpu_custom_call.1} parent=1 // pred_check_branch
      %38 = sbr.rel (0) target = $region21
    $region20: #{tpu_custom_call.1} parent=1 // pred_region
      %39 = dma.done [#allocation7], 16
    $region21: #{tpu_custom_call.1} parent=1 // pred_fallthru
      _
    %v40 = vld [vmem:[#allocation3] sm:$0xff]
    %v41 = vld [vmem:[#allocation6] sm:$0x1]
    %v43 = vlaneseq
    %v44 = vshrl.u32 %v43, 7
    %v45 = vsub.s32 0, %v44
    %v46 = vrot.slane %v41, %v45
    %v48 = vmul.f32 %v40, %v46
    %vm49 = vcmask 97280
    %v50 = vsel %vm49, %v48, 0.0
    %51 = vadd.xlane.f32.xlu0 %v50
    %v52 = vpop.xlane.xlu0 %51
    %s53 = sld [smem:[#allocation2]]
    %v54 = vstv %s53
    %v55 = vadd.f32 %v52, %v54
    %v56 = vxor.u32 %v55, 2147483648
    %v57 = vmul.f32 %v56, 1.442695
    %v58 = vpow.pop %v57
    %v59 = vadd.f32 %v58, 1.0
    %v60 = vrcp.pop %v59
    %v61 = vmul.f32 1.0, %v60
    %vm62 = vcmask 7168
    %63 = vst.msk [vmem:[#allocation8] sm:$0xff] %vm62, %v61
    // Predicated region
    $region22: #{tpu_custom_call.1} parent=1 // pred_check
      _
    $region23: #{tpu_custom_call.1} parent=1 // pred_check_branch
      %65 = sbr.rel (0) target = $region25
    $region24: #{tpu_custom_call.1} parent=1 // pred_region
      %s67 = ssub.s32 128, 128
      %68 = vsyncadd [#allocation5], %s67
      %s70 = sshll.u32 [#allocation8], 4
      %s71 = int_to_ptr.vmem [resolvable:$true] %s70
      %73 = dma.vmem_to_hbm [thread:$0]  %s71, 128, %s3, [#allocation5]
    $region25: #{tpu_custom_call.1} parent=1 // pred_fallthru
      _
    // Predicated region
    $region26: #{tpu_custom_call.1} parent=1 // pred_check
      _
    $region27: #{tpu_custom_call.1} parent=1 // pred_check_branch
      %75 = sbr.rel (0) target = $region29
    $region28: #{tpu_custom_call.1} parent=1 // pred_region
      %76 = dma.done [#allocation5], 128
    $region29: #{tpu_custom_call.1} parent=1 // pred_fallthru
      _
    %77 = vsyncpa [#allocation4], 1
    %78 = vsyncpa [#allocation7], 1
    %79 = vsyncpa [#allocation5], 1

</llo_original>
